<compile_context>
chip_gen: v6e
topology: v6e:2x2x1
jax: 0.10.0
libtpu: 0.0.40
codegen_flags: <defaults>
</compile_context>

<pallas_src>
import functools
import math

import jax
import jax.numpy as jnp
from jax import lax
from jax.experimental import pallas as pl
from jax.experimental.pallas import tpu as pltpu


# ----------------------------- Pallas kernel --------------------------------
def _basic_block_kernel(x_ref, w1_ref, b1_ref, w2_ref, b2_ref, mask_ref,
                        o_ref, slab_ref, h_ref, *, taps, xg, hg, n_pix):
    """Fused BasicBlock for one batch element.

    x_ref   : (1, C, Lx)      bf16  flattened zero-padded input (+ guard bands)
    w1_ref  : (Co, 9*C)       bf16  conv1 taps stacked on K (BN1 scale folded)
    b1_ref  : (Co, 1)         f32   BN1 bias
    w2_ref  : (Co, 9*Co)      bf16  conv2 taps stacked on K (BN2 scale folded)
    b2_ref  : (Co, 1)         f32   BN2 bias
    mask_ref: (1, n_pix)      f32   1 on interior pixels, 0 on pad ring / lane pad
    o_ref   : (1, Co, n_pix)  f32   output on the padded pixel grid (NCHW-flat)
    slab_ref: (9*C, n_pix)    bf16  scratch: tap-shifted activations (reused for
                                    both convs; C == Co when downsample is None)
    h_ref   : (Co, Lh)        bf16  scratch: conv1 activation with guard bands
    """
    c = x_ref.shape[1]
    co = w1_ref.shape[0]

    # One-time zero of the h guard bands (never written afterwards).  They only
    # feed pad-ring outputs that get cropped, but keep them deterministic.
    @pl.when(pl.program_id(0) == 0)
    def _():
        h_ref[:, pl.ds(0, hg)] = jnp.zeros((co, hg), h_ref.dtype)
        h_ref[:, pl.ds(hg + n_pix, hg)] = jnp.zeros((co, hg), h_ref.dtype)

    # ---- conv1 (+ folded BN1) + ReLU : one MXU dot with K = 9*C -------------
    # Build the shifted-activation slab: row block t = x shifted by tap offset t.
    for t, off in enumerate(taps):
        slab_ref[pl.ds(t * c, c), :] = x_ref[0, :, pl.ds(xg + off, n_pix)]
    acc1 = jnp.dot(w1_ref[...], slab_ref[...],
                   preferred_element_type=jnp.float32)
    # mask zeroes the padded ring (and the lane-pad tail) -> re-creates conv2's
    # zero padding for free.
    h = jnp.maximum(acc1 + b1_ref[...], 0.0) * mask_ref[...]

    # Stage h in VMEM (bf16) between its 128-aligned guard bands; never in HBM.
    h_ref[:, pl.ds(hg, n_pix)] = h.astype(h_ref.dtype)

    # ---- conv2 (+ folded BN2) + residual add : one MXU dot with K = 9*Co ----
    for t, off in enumerate(taps):
        slab_ref[pl.ds(t * co, co), :] = h_ref[:, pl.ds(hg + off, n_pix)]
    acc2 = jnp.dot(w2_ref[...], slab_ref[...],
                   preferred_element_type=jnp.float32)
    out = (acc2 + b2_ref[...]
           + x_ref[0, :, pl.ds(xg, n_pix)].astype(jnp.float32))
    # No activation after the residual add (matches the reference module).
    o_ref[0] = out.astype(o_ref.dtype)


# ------------------------------ JAX wrapper -----------------------------------
def basic_block_forward(x_nchw, params, *, stride=1, padding=1, dilation=1):
    # downsample=None in the reference module => stride must be 1, Cin == Cout,
    # and (for 3x3, stride 1) padding == dilation so spatial dims are preserved.
    assert stride == 1 and padding == dilation
    N, C, H, W = x_nchw.shape
    Cout = params["w1"].shape[0]
    assert C == Cout, "downsample=None requires in_planes == out_planes"

    d = dilation
    Hp, Wp = H + 2 * padding, W + 2 * padding
    P = Hp * Wp                                   # pixels on the padded grid
    P_pad = ((P + 127) // 128) * 128              # lane-dense stores
    guard = d * (Wp + 1)                          # max |tap offset| (exact)
    HG = 128                                      # aligned guard for h scratch
    Lx = guard + P_pad + guard
    Lh = HG + P_pad + HG

    # Flattened zero-padded input (channels on sublanes, pixels on lanes), bf16.
    # Cast BEFORE padding so the pad passes move half the bytes.
    # TODO(synk): pass raw NCHW with memory_space=pl.ANY and build this layout
    #             in-kernel via DMA to eliminate the host-side pad passes.
    xb = x_nchw.astype(jnp.bfloat16)
    x_pad = jnp.pad(xb, ((0, 0), (0, 0),
                         (padding, padding), (padding, padding)))
    x_ext = jnp.pad(x_pad.reshape(N, C, P),
                    ((0, 0), (0, 0), (guard, guard + (P_pad - P))))

    # Fold BN scale into the conv weights and stack the 9 taps on the
    # contraction axis: (Co, Ci, 3, 3) -> (Co, 9*Ci), column block t = kh*3+kw.
    def prep(w, scale, bias):
        w_s = w * scale[:, None, None, None]                       # (Co,Ci,3,3)
        w_stk = jnp.transpose(w_s, (0, 2, 3, 1)).reshape(
            w.shape[0], 9 * w.shape[1])
        return (w_stk.astype(jnp.bfloat16),
                bias.reshape(-1, 1).astype(jnp.float32))

    w1_t, b1 = prep(params["w1"], params["scale1"], params["bias1"])
    w2_t, b2 = prep(params["w2"], params["scale2"], params["bias2"])

    # Interior-pixel mask over the padded grid (zero on pad ring and lane pad).
    rows = (jnp.arange(Hp) >= d) & (jnp.arange(Hp) < d + H)
    cols = (jnp.arange(Wp) >= d) & (jnp.arange(Wp) < d + W)
    mask = (rows[:, None] & cols[None, :]).reshape(P).astype(jnp.float32)
    mask = jnp.pad(mask, (0, P_pad - P)).reshape(1, P_pad)

    # Constant flat offsets of the 9 taps (kh outer, kw inner, matches weights).
    taps = tuple(((kh - 1) * d) * Wp + (kw - 1) * d
                 for kh in range(3) for kw in range(3))
    kernel = functools.partial(_basic_block_kernel, taps=taps, xg=guard,
                               hg=HG, n_pix=P_pad)

    out_flat = pl.pallas_call(
        kernel,
        out_shape=jax.ShapeDtypeStruct((N, Cout, P_pad), jnp.float32),
        grid_spec=pltpu.PrefetchScalarGridSpec(
            num_scalar_prefetch=0,
            grid=(N,),
            in_specs=[
                pl.BlockSpec((1, C, Lx), lambda n: (n, 0, 0)),      # x_ext
                pl.BlockSpec((Cout, 9 * C), lambda n: (0, 0)),      # w1 stacked
                pl.BlockSpec((Cout, 1), lambda n: (0, 0)),          # bias1
                pl.BlockSpec((Cout, 9 * Cout), lambda n: (0, 0)),   # w2 stacked
                pl.BlockSpec((Cout, 1), lambda n: (0, 0)),          # bias2
                pl.BlockSpec((1, P_pad), lambda n: (0, 0)),         # mask
            ],
            out_specs=pl.BlockSpec((1, Cout, P_pad), lambda n: (n, 0, 0)),
            scratch_shapes=[
                pltpu.VMEM((9 * C, P_pad), jnp.bfloat16),   # shifted-tap slab
                pltpu.VMEM((Cout, Lh), jnp.bfloat16),       # conv1 activation
            ],
        ),
        compiler_params=pltpu.CompilerParams(
            dimension_semantics=("parallel",),   # batch shards across TCs
        ),
    )(x_ext, w1_t, b1, w2_t, b2, mask)

    # Crop the interior of the padded output grid; layout is already NCHW.
    # (Pad-ring / lane-pad values are meaningless by construction.)
    out = out_flat[:, :, :P].reshape(N, Cout, Hp, Wp)[:, :, d:d + H, d:d + W]
    return out


# --------------------------- params / reference -------------------------------
def _fold_bn(gamma, beta, mean, var, eps=1e-5):
    scale = gamma * lax.rsqrt(var + eps)
    bias = beta - mean * scale
    return scale, bias


def init_basic_block_params(key, in_planes, out_planes):
    ks = jax.random.split(key, 10)
    w1 = jax.random.normal(ks[0], (out_planes, in_planes, 3, 3), jnp.float32) \
         * (1.0 / math.sqrt(in_planes * 9))
    w2 = jax.random.normal(ks[1], (out_planes, out_planes, 3, 3), jnp.float32) \
         * (1.0 / math.sqrt(out_planes * 9))
    # Eval-mode BatchNorm statistics/affine.
    g1 = 1.0 + 0.1 * jax.random.normal(ks[2], (out_planes,), jnp.float32)
    b1 = 0.1 * jax.random.normal(ks[3], (out_planes,), jnp.float32)
    m1 = 0.1 * jax.random.normal(ks[4], (out_planes,), jnp.float32)
    v1 = 1.0 + 0.1 * jax.random.uniform(ks[5], (out_planes,), jnp.float32)
    g2 = 1.0 + 0.1 * jax.random.normal(ks[6], (out_planes,), jnp.float32)
    b2 = 0.1 * jax.random.normal(ks[7], (out_planes,), jnp.float32)
    m2 = 0.1 * jax.random.normal(ks[8], (out_planes,), jnp.float32)
    v2 = 1.0 + 0.1 * jax.random.uniform(ks[9], (out_planes,), jnp.float32)
    s1, bb1 = _fold_bn(g1, b1, m1, v1)
    s2, bb2 = _fold_bn(g2, b2, m2, v2)
    return dict(w1=w1, w2=w2, scale1=s1, bias1=bb1, scale2=s2, bias2=bb2)


def ref_forward(x, params, *, padding=1, dilation=1):
    """Pure-JAX reference with matching numerics (bf16 inputs, f32 accumulate)."""
    def conv(y, w):
        return lax.conv_general_dilated(
            y.astype(jnp.bfloat16), w.astype(jnp.bfloat16),
            window_strides=(1, 1),
            padding=[(padding, padding), (padding, padding)],
            rhs_dilation=(dilation, dilation),
            dimension_numbers=("NCHW", "OIHW", "NCHW"),
            preferred_element_type=jnp.float32)

    w1s = params["w1"] * params["scale1"][:, None, None, None]
    w2s = params["w2"] * params["scale2"][:, None, None, None]
    xb = x.astype(jnp.bfloat16)
    h = jnp.maximum(conv(xb, w1s) + params["bias1"][None, :, None, None], 0.0)
    out = conv(h, w2s) + params["bias2"][None, :, None, None]
    return out + xb.astype(jnp.float32)   # no activation after residual (spec)


# --------------------------------- main ---------------------------------------
if __name__ == "__main__":
    key = jax.random.PRNGKey(0)
    kx, kp = jax.random.split(key)

    N, C, H, W = 2, 8, 16, 16   # in_planes == out_planes, stride=1, downsample=None
    x = jax.random.normal(kx, (N, C, H, W), jnp.float32)
    params = init_basic_block_params(kp, in_planes=C, out_planes=C)

    out = jax.block_until_ready(
        basic_block_forward(x, params, stride=1, padding=1, dilation=1))
    ref = jax.block_until_ready(ref_forward(x, params, padding=1, dilation=1))

    assert out.shape == ref.shape == (N, C, H, W)
    err = float(jnp.max(jnp.abs(out - ref)))
    assert jnp.allclose(out, ref, rtol=1e-2, atol=1e-2), f"max abs err {err}"
    print("KERNEL_OK")
</pallas_src>

<mosaic_0001>
module attributes {stable_mosaic.version = 11 : i64} {
  func.func @_basic_block_kernel(%arg0: i32, %arg1: memref<1x8x422xbf16, #tpu.memory_space<vmem>>, %arg2: memref<8x72xbf16, #tpu.memory_space<vmem>>, %arg3: memref<8x1xf32, #tpu.memory_space<vmem>>, %arg4: memref<8x72xbf16, #tpu.memory_space<vmem>>, %arg5: memref<8x1xf32, #tpu.memory_space<vmem>>, %arg6: memref<1x384xf32, #tpu.memory_space<vmem>>, %arg7: memref<1x8x384xf32, #tpu.memory_space<vmem>>, %arg8: memref<72x384xbf16, #tpu.memory_space<vmem>>, %arg9: memref<8x640xbf16, #tpu.memory_space<vmem>>) attributes {dimension_semantics = [#tpu.dimension_semantics<parallel>], iteration_bounds = array<i64: 2>, scalar_prefetch = 0 : i64, scratch_operands = 2 : i64, tpu.core_type = #tpu.core_type<tc>, window_params = [{transform_indices = @transform_0, window_bounds = array<i64: 1, 8, 422>}, {pipeline_mode = #tpu.pipeline_mode<synchronous>, transform_indices = @transform_1, window_bounds = array<i64: 8, 72>}, {pipeline_mode = #tpu.pipeline_mode<synchronous>, transform_indices = @transform_2, window_bounds = array<i64: 8, 1>}, {pipeline_mode = #tpu.pipeline_mode<synchronous>, transform_indices = @transform_3, window_bounds = array<i64: 8, 72>}, {pipeline_mode = #tpu.pipeline_mode<synchronous>, transform_indices = @transform_4, window_bounds = array<i64: 8, 1>}, {pipeline_mode = #tpu.pipeline_mode<synchronous>, transform_indices = @transform_5, window_bounds = array<i64: 1, 384>}, {transform_indices = @transform_6, window_bounds = array<i64: 1, 8, 384>}]} {
    %c0_i32 = arith.constant 0 : i32
    %0 = arith.cmpi eq, %arg0, %c0_i32 : i32
    %1 = arith.extui %0 : i1 to i32
    %c0_i32_0 = arith.constant 0 : i32
    %2 = arith.cmpi ne, %1, %c0_i32_0 : i32
    scf.if %2 {
      %cst_80 = arith.constant 0.000000e+00 : bf16
      %74 = vector.broadcast %cst_80 : bf16 to vector<8x128xbf16>
      %c0_81 = arith.constant 0 : index
      %c0_82 = arith.constant 0 : index
      %75 = vector.load %arg9[%c0_81, %c0_82] : memref<8x640xbf16, #tpu.memory_space<vmem>>, vector<8x128xbf16>
      tpu.vector_store %arg9[%c0_81, %c0_82], %74 {strides = array<i32>} : memref<8x640xbf16, #tpu.memory_space<vmem>>, vector<8x128xbf16>,
      %cst_83 = arith.constant 0.000000e+00 : bf16
      %76 = vector.broadcast %cst_83 : bf16 to vector<8x128xbf16>
      %c0_84 = arith.constant 0 : index
      %c512 = arith.constant 512 : index
      %77 = vector.load %arg9[%c0_84, %c512] : memref<8x640xbf16, #tpu.memory_space<vmem>>, vector<8x128xbf16>
      tpu.vector_store %arg9[%c0_84, %c512], %76 {strides = array<i32>} : memref<8x640xbf16, #tpu.memory_space<vmem>>, vector<8x128xbf16>,
    } else {
    }
    %c0 = arith.constant 0 : index
    %c0_1 = arith.constant 0 : index
    %c0_2 = arith.constant 0 : index
    %3 = vector.load %arg1[%c0, %c0_1, %c0_2] : memref<1x8x422xbf16, #tpu.memory_space<vmem>>, vector<1x8x384xbf16>
    %4 = vector.shape_cast %3 : vector<1x8x384xbf16> to vector<8x384xbf16>
    %c0_3 = arith.constant 0 : index
    %c0_4 = arith.constant 0 : index
    %5 = vector.load %arg8[%c0_3, %c0_4] : memref<72x384xbf16, #tpu.memory_space<vmem>>, vector<8x384xbf16>
    tpu.vector_store %arg8[%c0_3, %c0_4], %4 {strides = array<i32>} : memref<72x384xbf16, #tpu.memory_space<vmem>>, vector<8x384xbf16>,
    %c0_5 = arith.constant 0 : index
    %c0_6 = arith.constant 0 : index
    %c1 = arith.constant 1 : index
    %6 = vector.load %arg1[%c0_5, %c0_6, %c1] : memref<1x8x422xbf16, #tpu.memory_space<vmem>>, vector<1x8x384xbf16>
    %7 = vector.shape_cast %6 : vector<1x8x384xbf16> to vector<8x384xbf16>
    %c8 = arith.constant 8 : index
    %c0_7 = arith.constant 0 : index
    %8 = vector.load %arg8[%c8, %c0_7] : memref<72x384xbf16, #tpu.memory_space<vmem>>, vector<8x384xbf16>
    tpu.vector_store %arg8[%c8, %c0_7], %7 {strides = array<i32>} : memref<72x384xbf16, #tpu.memory_space<vmem>>, vector<8x384xbf16>,
    %c0_8 = arith.constant 0 : index
    %c0_9 = arith.constant 0 : index
    %c2 = arith.constant 2 : index
    %9 = vector.load %arg1[%c0_8, %c0_9, %c2] : memref<1x8x422xbf16, #tpu.memory_space<vmem>>, vector<1x8x384xbf16>
    %10 = vector.shape_cast %9 : vector<1x8x384xbf16> to vector<8x384xbf16>
    %c16 = arith.constant 16 : index
    %c0_10 = arith.constant 0 : index
    %11 = vector.load %arg8[%c16, %c0_10] : memref<72x384xbf16, #tpu.memory_space<vmem>>, vector<8x384xbf16>
    tpu.vector_store %arg8[%c16, %c0_10], %10 {strides = array<i32>} : memref<72x384xbf16, #tpu.memory_space<vmem>>, vector<8x384xbf16>,
    %c0_11 = arith.constant 0 : index
    %c0_12 = arith.constant 0 : index
    %c18 = arith.constant 18 : index
    %12 = vector.load %arg1[%c0_11, %c0_12, %c18] : memref<1x8x422xbf16, #tpu.memory_space<vmem>>, vector<1x8x384xbf16>
    %13 = vector.shape_cast %12 : vector<1x8x384xbf16> to vector<8x384xbf16>
    %c24 = arith.constant 24 : index
    %c0_13 = arith.constant 0 : index
    %14 = vector.load %arg8[%c24, %c0_13] : memref<72x384xbf16, #tpu.memory_space<vmem>>, vector<8x384xbf16>
    tpu.vector_store %arg8[%c24, %c0_13], %13 {strides = array<i32>} : memref<72x384xbf16, #tpu.memory_space<vmem>>, vector<8x384xbf16>,
    %c0_14 = arith.constant 0 : index
    %c0_15 = arith.constant 0 : index
    %c19 = arith.constant 19 : index
    %15 = vector.load %arg1[%c0_14, %c0_15, %c19] : memref<1x8x422xbf16, #tpu.memory_space<vmem>>, vector<1x8x384xbf16>
    %16 = vector.shape_cast %15 : vector<1x8x384xbf16> to vector<8x384xbf16>
    %c32 = arith.constant 32 : index
    %c0_16 = arith.constant 0 : index
    %17 = vector.load %arg8[%c32, %c0_16] : memref<72x384xbf16, #tpu.memory_space<vmem>>, vector<8x384xbf16>
    tpu.vector_store %arg8[%c32, %c0_16], %16 {strides = array<i32>} : memref<72x384xbf16, #tpu.memory_space<vmem>>, vector<8x384xbf16>,
    %c0_17 = arith.constant 0 : index
    %c0_18 = arith.constant 0 : index
    %c20 = arith.constant 20 : index
    %18 = vector.load %arg1[%c0_17, %c0_18, %c20] : memref<1x8x422xbf16, #tpu.memory_space<vmem>>, vector<1x8x384xbf16>
    %19 = vector.shape_cast %18 : vector<1x8x384xbf16> to vector<8x384xbf16>
    %c40 = arith.constant 40 : index
    %c0_19 = arith.constant 0 : index
    %20 = vector.load %arg8[%c40, %c0_19] : memref<72x384xbf16, #tpu.memory_space<vmem>>, vector<8x384xbf16>
    tpu.vector_store %arg8[%c40, %c0_19], %19 {strides = array<i32>} : memref<72x384xbf16, #tpu.memory_space<vmem>>, vector<8x384xbf16>,
    %c0_20 = arith.constant 0 : index
    %c0_21 = arith.constant 0 : index
    %c36 = arith.constant 36 : index
    %21 = vector.load %arg1[%c0_20, %c0_21, %c36] : memref<1x8x422xbf16, #tpu.memory_space<vmem>>, vector<1x8x384xbf16>
    %22 = vector.shape_cast %21 : vector<1x8x384xbf16> to vector<8x384xbf16>
    %c48 = arith.constant 48 : index
    %c0_22 = arith.constant 0 : index
    %23 = vector.load %arg8[%c48, %c0_22] : memref<72x384xbf16, #tpu.memory_space<vmem>>, vector<8x384xbf16>
    tpu.vector_store %arg8[%c48, %c0_22], %22 {strides = array<i32>} : memref<72x384xbf16, #tpu.memory_space<vmem>>, vector<8x384xbf16>,
    %c0_23 = arith.constant 0 : index
    %c0_24 = arith.constant 0 : index
    %c37 = arith.constant 37 : index
    %24 = vector.load %arg1[%c0_23, %c0_24, %c37] : memref<1x8x422xbf16, #tpu.memory_space<vmem>>, vector<1x8x384xbf16>
    %25 = vector.shape_cast %24 : vector<1x8x384xbf16> to vector<8x384xbf16>
    %c56 = arith.constant 56 : index
    %c0_25 = arith.constant 0 : index
    %26 = vector.load %arg8[%c56, %c0_25] : memref<72x384xbf16, #tpu.memory_space<vmem>>, vector<8x384xbf16>
    tpu.vector_store %arg8[%c56, %c0_25], %25 {strides = array<i32>} : memref<72x384xbf16, #tpu.memory_space<vmem>>, vector<8x384xbf16>,
    %c0_26 = arith.constant 0 : index
    %c0_27 = arith.constant 0 : index
    %c38 = arith.constant 38 : index
    %27 = vector.load %arg1[%c0_26, %c0_27, %c38] : memref<1x8x422xbf16, #tpu.memory_space<vmem>>, vector<1x8x384xbf16>
    %28 = vector.shape_cast %27 : vector<1x8x384xbf16> to vector<8x384xbf16>
    %c64 = arith.constant 64 : index
    %c0_28 = arith.constant 0 : index
    %29 = vector.load %arg8[%c64, %c0_28] : memref<72x384xbf16, #tpu.memory_space<vmem>>, vector<8x384xbf16>
    tpu.vector_store %arg8[%c64, %c0_28], %28 {strides = array<i32>} : memref<72x384xbf16, #tpu.memory_space<vmem>>, vector<8x384xbf16>,
    %c0_29 = arith.constant 0 : index
    %c0_30 = arith.constant 0 : index
    %30 = vector.load %arg2[%c0_29, %c0_30] : memref<8x72xbf16, #tpu.memory_space<vmem>>, vector<8x72xbf16>
    %c0_31 = arith.constant 0 : index
    %c0_32 = arith.constant 0 : index
    %31 = vector.load %arg8[%c0_31, %c0_32] : memref<72x384xbf16, #tpu.memory_space<vmem>>, vector<72x384xbf16>
    %cst = arith.constant dense<0.000000e+00> : vector<8x384xf32>
    %32 = tpu.matmul %30, %31, %cst {dimension_numbers = #tpu.dot_dimension_numbers<[1], [0], [0], [1], [0, 0, 1, 1], [], []>} : vector<8x72xbf16>, vector<72x384xbf16>, vector<8x384xf32> -> vector<8x384xf32>
    %c0_33 = arith.constant 0 : index
    %c0_34 = arith.constant 0 : index
    %33 = vector.load %arg3[%c0_33, %c0_34] : memref<8x1xf32, #tpu.memory_space<vmem>>, vector<8x1xf32>
    %34 = vector.broadcast %33 : vector<8x1xf32> to vector<8x384xf32>
    %35 = arith.addf %32, %34 : vector<8x384xf32>
    %cst_35 = arith.constant 0.000000e+00 : f32
    %36 = vector.broadcast %cst_35 : f32 to vector<8x384xf32>
    %37 = arith.maximumf %35, %36 : vector<8x384xf32>
    %c0_36 = arith.constant 0 : index
    %c0_37 = arith.constant 0 : index
    %38 = vector.load %arg6[%c0_36, %c0_37] : memref<1x384xf32, #tpu.memory_space<vmem>>, vector<1x384xf32>
    %39 = vector.broadcast %38 : vector<1x384xf32> to vector<8x384xf32>
    %40 = arith.mulf %37, %39 : vector<8x384xf32>
    %41 = arith.truncf %40 : vector<8x384xf32> to vector<8x384xbf16>
    %c0_38 = arith.constant 0 : index
    %c128 = arith.constant 128 : index
    %42 = vector.load %arg9[%c0_38, %c128] : memref<8x640xbf16, #tpu.memory_space<vmem>>, vector<8x384xbf16>
    tpu.vector_store %arg9[%c0_38, %c128], %41 {strides = array<i32>} : memref<8x640xbf16, #tpu.memory_space<vmem>>, vector<8x384xbf16>,
    %c0_39 = arith.constant 0 : index
    %c109 = arith.constant 109 : index
    %43 = vector.load %arg9[%c0_39, %c109] : memref<8x640xbf16, #tpu.memory_space<vmem>>, vector<8x384xbf16>
    %c0_40 = arith.constant 0 : index
    %c0_41 = arith.constant 0 : index
    %44 = vector.load %arg8[%c0_40, %c0_41] : memref<72x384xbf16, #tpu.memory_space<vmem>>, vector<8x384xbf16>
    tpu.vector_store %arg8[%c0_40, %c0_41], %43 {strides = array<i32>} : memref<72x384xbf16, #tpu.memory_space<vmem>>, vector<8x384xbf16>,
    %c0_42 = arith.constant 0 : index
    %c110 = arith.constant 110 : index
    %45 = vector.load %arg9[%c0_42, %c110] : memref<8x640xbf16, #tpu.memory_space<vmem>>, vector<8x384xbf16>
    %c8_43 = arith.constant 8 : index
    %c0_44 = arith.constant 0 : index
    %46 = vector.load %arg8[%c8_43, %c0_44] : memref<72x384xbf16, #tpu.memory_space<vmem>>, vector<8x384xbf16>
    tpu.vector_store %arg8[%c8_43, %c0_44], %45 {strides = array<i32>} : memref<72x384xbf16, #tpu.memory_space<vmem>>, vector<8x384xbf16>,
    %c0_45 = arith.constant 0 : index
    %c111 = arith.constant 111 : index
    %47 = vector.load %arg9[%c0_45, %c111] : memref<8x640xbf16, #tpu.memory_space<vmem>>, vector<8x384xbf16>
    %c16_46 = arith.constant 16 : index
    %c0_47 = arith.constant 0 : index
    %48 = vector.load %arg8[%c16_46, %c0_47] : memref<72x384xbf16, #tpu.memory_space<vmem>>, vector<8x384xbf16>
    tpu.vector_store %arg8[%c16_46, %c0_47], %47 {strides = array<i32>} : memref<72x384xbf16, #tpu.memory_space<vmem>>, vector<8x384xbf16>,
    %c0_48 = arith.constant 0 : index
    %c127 = arith.constant 127 : index
    %49 = vector.load %arg9[%c0_48, %c127] : memref<8x640xbf16, #tpu.memory_space<vmem>>, vector<8x384xbf16>
    %c24_49 = arith.constant 24 : index
    %c0_50 = arith.constant 0 : index
    %50 = vector.load %arg8[%c24_49, %c0_50] : memref<72x384xbf16, #tpu.memory_space<vmem>>, vector<8x384xbf16>
    tpu.vector_store %arg8[%c24_49, %c0_50], %49 {strides = array<i32>} : memref<72x384xbf16, #tpu.memory_space<vmem>>, vector<8x384xbf16>,
    %c0_51 = arith.constant 0 : index
    %c128_52 = arith.constant 128 : index
    %51 = vector.load %arg9[%c0_51, %c128_52] : memref<8x640xbf16, #tpu.memory_space<vmem>>, vector<8x384xbf16>
    %c32_53 = arith.constant 32 : index
    %c0_54 = arith.constant 0 : index
    %52 = vector.load %arg8[%c32_53, %c0_54] : memref<72x384xbf16, #tpu.memory_space<vmem>>, vector<8x384xbf16>
    tpu.vector_store %arg8[%c32_53, %c0_54], %51 {strides = array<i32>} : memref<72x384xbf16, #tpu.memory_space<vmem>>, vector<8x384xbf16>,
    %c0_55 = arith.constant 0 : index
    %c129 = arith.constant 129 : index
    %53 = vector.load %arg9[%c0_55, %c129] : memref<8x640xbf16, #tpu.memory_space<vmem>>, vector<8x384xbf16>
    %c40_56 = arith.constant 40 : index
    %c0_57 = arith.constant 0 : index
    %54 = vector.load %arg8[%c40_56, %c0_57] : memref<72x384xbf16, #tpu.memory_space<vmem>>, vector<8x384xbf16>
    tpu.vector_store %arg8[%c40_56, %c0_57], %53 {strides = array<i32>} : memref<72x384xbf16, #tpu.memory_space<vmem>>, vector<8x384xbf16>,
    %c0_58 = arith.constant 0 : index
    %c145 = arith.constant 145 : index
    %55 = vector.load %arg9[%c0_58, %c145] : memref<8x640xbf16, #tpu.memory_space<vmem>>, vector<8x384xbf16>
    %c48_59 = arith.constant 48 : index
    %c0_60 = arith.constant 0 : index
    %56 = vector.load %arg8[%c48_59, %c0_60] : memref<72x384xbf16, #tpu.memory_space<vmem>>, vector<8x384xbf16>
    tpu.vector_store %arg8[%c48_59, %c0_60], %55 {strides = array<i32>} : memref<72x384xbf16, #tpu.memory_space<vmem>>, vector<8x384xbf16>,
    %c0_61 = arith.constant 0 : index
    %c146 = arith.constant 146 : index
    %57 = vector.load %arg9[%c0_61, %c146] : memref<8x640xbf16, #tpu.memory_space<vmem>>, vector<8x384xbf16>
    %c56_62 = arith.constant 56 : index
    %c0_63 = arith.constant 0 : index
    %58 = vector.load %arg8[%c56_62, %c0_63] : memref<72x384xbf16, #tpu.memory_space<vmem>>, vector<8x384xbf16>
    tpu.vector_store %arg8[%c56_62, %c0_63], %57 {strides = array<i32>} : memref<72x384xbf16, #tpu.memory_space<vmem>>, vector<8x384xbf16>,
    %c0_64 = arith.constant 0 : index
    %c147 = arith.constant 147 : index
    %59 = vector.load %arg9[%c0_64, %c147] : memref<8x640xbf16, #tpu.memory_space<vmem>>, vector<8x384xbf16>
    %c64_65 = arith.constant 64 : index
    %c0_66 = arith.constant 0 : index
    %60 = vector.load %arg8[%c64_65, %c0_66] : memref<72x384xbf16, #tpu.memory_space<vmem>>, vector<8x384xbf16>
    tpu.vector_store %arg8[%c64_65, %c0_66], %59 {strides = array<i32>} : memref<72x384xbf16, #tpu.memory_space<vmem>>, vector<8x384xbf16>,
    %c0_67 = arith.constant 0 : index
    %c0_68 = arith.constant 0 : index
    %61 = vector.load %arg4[%c0_67, %c0_68] : memref<8x72xbf16, #tpu.memory_space<vmem>>, vector<8x72xbf16>
    %c0_69 = arith.constant 0 : index
    %c0_70 = arith.constant 0 : index
    %62 = vector.load %arg8[%c0_69, %c0_70] : memref<72x384xbf16, #tpu.memory_space<vmem>>, vector<72x384xbf16>
    %cst_71 = arith.constant dense<0.000000e+00> : vector<8x384xf32>
    %63 = tpu.matmul %61, %62, %cst_71 {dimension_numbers = #tpu.dot_dimension_numbers<[1], [0], [0], [1], [0, 0, 1, 1], [], []>} : vector<8x72xbf16>, vector<72x384xbf16>, vector<8x384xf32> -> vector<8x384xf32>
    %c0_72 = arith.constant 0 : index
    %c0_73 = arith.constant 0 : index
    %64 = vector.load %arg5[%c0_72, %c0_73] : memref<8x1xf32, #tpu.memory_space<vmem>>, vector<8x1xf32>
    %65 = vector.broadcast %64 : vector<8x1xf32> to vector<8x384xf32>
    %66 = arith.addf %63, %65 : vector<8x384xf32>
    %c0_74 = arith.constant 0 : index
    %c0_75 = arith.constant 0 : index
    %c19_76 = arith.constant 19 : index
    %67 = vector.load %arg1[%c0_74, %c0_75, %c19_76] : memref<1x8x422xbf16, #tpu.memory_space<vmem>>, vector<1x8x384xbf16>
    %68 = vector.shape_cast %67 : vector<1x8x384xbf16> to vector<8x384xbf16>
    %69 = arith.extf %68 : vector<8x384xbf16> to vector<8x384xf32>
    %70 = arith.addf %66, %69 : vector<8x384xf32>
    %c0_77 = arith.constant 0 : index
    %c0_78 = arith.constant 0 : index
    %c0_79 = arith.constant 0 : index
    %71 = vector.load %arg7[%c0_77, %c0_78, %c0_79] : memref<1x8x384xf32, #tpu.memory_space<vmem>>, vector<1x8x384xf32>
    %72 = vector.shape_cast %71 : vector<1x8x384xf32> to vector<8x384xf32>
    %73 = vector.shape_cast %70 : vector<8x384xf32> to vector<1x8x384xf32>
    tpu.vector_store %arg7[%c0_77, %c0_78, %c0_79], %73 {strides = array<i32>} : memref<1x8x384xf32, #tpu.memory_space<vmem>>, vector<1x8x384xf32>,
    return
  }
  func.func @transform_0(%arg0: i32) -> (i32, i32, i32) {
    %c0_i32 = arith.constant 0 : i32
    %c0_i32_0 = arith.constant 0 : i32
    %c0_i32_1 = arith.constant 0 : i32
    return %arg0, %c0_i32, %c0_i32_0 : i32, i32, i32
  }
  func.func @transform_1(%arg0: i32) -> (i32, i32) {
    %c0_i32 = arith.constant 0 : i32
    %c0_i32_0 = arith.constant 0 : i32
    %c0_i32_1 = arith.constant 0 : i32
    return %c0_i32, %c0_i32_0 : i32, i32
  }
  func.func @transform_2(%arg0: i32) -> (i32, i32) {
    %c0_i32 = arith.constant 0 : i32
    %c0_i32_0 = arith.constant 0 : i32
    %c0_i32_1 = arith.constant 0 : i32
    return %c0_i32, %c0_i32_0 : i32, i32
  }
  func.func @transform_3(%arg0: i32) -> (i32, i32) {
    %c0_i32 = arith.constant 0 : i32
    %c0_i32_0 = arith.constant 0 : i32
    %c0_i32_1 = arith.constant 0 : i32
    return %c0_i32, %c0_i32_0 : i32, i32
  }
  func.func @transform_4(%arg0: i32) -> (i32, i32) {
    %c0_i32 = arith.constant 0 : i32
    %c0_i32_0 = arith.constant 0 : i32
    %c0_i32_1 = arith.constant 0 : i32
    return %c0_i32, %c0_i32_0 : i32, i32
  }
  func.func @transform_5(%arg0: i32) -> (i32, i32) {
    %c0_i32 = arith.constant 0 : i32
    %c0_i32_0 = arith.constant 0 : i32
    %c0_i32_1 = arith.constant 0 : i32
    return %c0_i32, %c0_i32_0 : i32, i32
  }
  func.func @transform_6(%arg0: i32) -> (i32, i32, i32) {
    %c0_i32 = arith.constant 0 : i32
    %c0_i32_0 = arith.constant 0 : i32
    %c0_i32_1 = arith.constant 0 : i32
    return %arg0, %c0_i32, %c0_i32_0 : i32, i32, i32
  }
}

</mosaic_0001>

<llo_original>
// kernel: tpu_custom_call.1
$region0: #{tpu_custom_call.1}
  #allocation0 [shape = 'u32[]', space=smem, size = 0x4, offset = 0x4, fixed_abs, tag = 'smem constant byte address 0x4 - core index']
  #allocation1 [shape = 'u32[144,128]{1,0:T(1,128)}', space=vmem, size = 0x12000, scoped, tag = 'internal scratch']
  #allocation2 [shape = 'bf16[72,384]{1,0:T(8,128)(2,1)}', space=vmem, size = 0xd800, scoped, tag = 'scratch operand']
  #allocation3 [shape = 'bf16[8,640]{1,0:T(8,128)(2,1)}', space=vmem, size = 0x2800, scoped, tag = 'scratch operand']
  %s0 = inlined_call_operand.hbm [shape: bf16[2,8,422], index: 0, kind: input, shape index: {}]
  %s1 = inlined_call_operand.vmem [shape: bf16[8,72], index: 1, kind: input, shape index: {}]
  %s2 = inlined_call_operand.vmem [shape: f32[8,1], index: 2, kind: input, shape index: {}]
  %s3 = inlined_call_operand.vmem [shape: bf16[8,72], index: 3, kind: input, shape index: {}]
  %s4 = inlined_call_operand.vmem [shape: f32[8,1], index: 4, kind: input, shape index: {}]
  %s5 = inlined_call_operand.vmem [shape: f32[1,384], index: 5, kind: input, shape index: {}]
  %s6 = inlined_call_operand.hbm [shape: f32[2,8,384], index: 6, kind: output, shape index: {}]
  %s7 = sld [smem:[#allocation0]]
  $region65: #{tpu_custom_call.1} parent=0
    _
  %s9 = ssub.s32 1, %s7
  %s10 = scalar_select 0, %s9, %s7
  $region1: #{tpu_custom_call.1} parent=0
    #allocation4 [shape = 'u8[16384]{0}', space=vmem, size = 0x4000, scoped, tag = 'input window, operand 0']
    #allocation5 [shape = 's32[2]{0}', space=sflag, size = 0x8, scoped, tag = 'scoped memory for tpu_custom_call.1']
    #allocation6 [shape = 's32[2]{0}', space=sflag, size = 0x8, scoped, tag = 'scoped memory for tpu_custom_call.1']
    #allocation7 [shape = 'u8[24576]{0}', space=vmem, size = 0x6000, scoped, tag = 'output window, operand 0']
    %11 = vsyncpa [#allocation5], 0
    %s12 = scalar_lea.sflag [#allocation5], 1
    %13 = vsyncpa %s12, 0
    %14 = vsyncpa [#allocation6], 0
    %s15 = scalar_lea.sflag [#allocation6], 1
    %16 = vsyncpa %s15, 0
    loop: start=0, step=1, limit=4
    $region2: #{tpu_custom_call.1} parent=1 // loop_pre_header
      _
    $region3: #{tpu_custom_call.1} parent=1 // loop_header
      %s18 = sphi 0, %s22
      %p19 = scmp.ge.s32.totalorder %s18, 4
      %s28 = sphi 0, %s30
      %s31 = sphi 0, %s28
      %s32 = sphi 0, %s31
      %s48 = sphi 0, %s32
      %s52 = sphi 0, %s52
      %s54 = sphi 0, %s52
      %s55 = sphi 0, %s54
      %s69 = sphi 0, %s55
      %s73 = sphi 0, %s73
      %s75 = sphi 0, %s73
      %s76 = sphi 0, %s75
      %s90 = sphi 0, %s76
      %s94 = sphi 0, %s94
      %s96 = sphi 0, %s94
      %s97 = sphi 0, %s96
      %s111 = sphi 0, %s97
      %s115 = sphi 0, %s115
      %s117 = sphi 0, %s115
      %s118 = sphi 0, %s117
      %s132 = sphi 0, %s118
      %s136 = sphi 0, %s136
      %s138 = sphi 0, %s136
      %s139 = sphi 0, %s138
      %s153 = sphi 0, %s139
      %s159 = sphi 0, %s161
      %s162 = sphi 0, %s159
      %s163 = sphi 0, %s162
      %s179 = sphi 0, %s163
    $region4: #{tpu_custom_call.1} parent=1 // loop_header_branch
      %21 = sbr.rel (%p19) target = $region8
    $region5: #{tpu_custom_call.1} parent=1 // loop_body
      %s23 = ssub.s32 %s18, 1
      %s24 = ssub.s32 %s18, 2
      %s25 = sadd.s32 %s18, 1
      %s26 = ssub.s32 %s18, %s25
      %p27 = scmp.eq.s32.totalorder %s26, 0
      %s29 = sadd.s32 %s28, 1
      %s30 = scalar_select %p27, %s28, %s29
      %p33 = pneg %p27
      %p34 = scmp.eq.s32.totalorder %s18, 1
      %p35 = por %p33, %p34
      %p36 = scmp.ne.s32.totalorder %s28, %s31
      %p37 = scmp.eq.s32.totalorder %s18, 0
      %p38 = por %p36, %p37
      %p39 = scmp.ne.s32.totalorder %s28, %s31
      %p40 = scmp.eq.s32.totalorder %s23, 1
      %p41 = por %p39, %p40
      %p42 = scmp.ne.s32.totalorder %s31, %s32
      %p43 = scmp.eq.s32.totalorder %s23, 0
      %p44 = por %p42, %p43
      %p45 = scmp.ne.s32.totalorder %s31, %s32
      %p46 = scmp.eq.s32.totalorder %s24, 1
      %p47 = por %p45, %p46
      %p49 = scmp.ne.s32.totalorder %s32, %s48
      %p50 = scmp.eq.s32.totalorder %s24, 0
      %p51 = por %p49, %p50
      %s53 = sadd.s32 %s52, 1
      %p56 = scmp.eq.s32.totalorder %s18, 1
      %p57 = scmp.ne.s32.totalorder %s52, %s54
      %p58 = scmp.eq.s32.totalorder %s18, 0
      %p59 = por %p57, %p58
      %p60 = scmp.ne.s32.totalorder %s52, %s54
      %p61 = scmp.eq.s32.totalorder %s23, 1
      %p62 = por %p60, %p61
      %p63 = scmp.ne.s32.totalorder %s54, %s55
      %p64 = scmp.eq.s32.totalorder %s23, 0
      %p65 = por %p63, %p64
      %p66 = scmp.ne.s32.totalorder %s54, %s55
      %p67 = scmp.eq.s32.totalorder %s24, 1
      %p68 = por %p66, %p67
      %p70 = scmp.ne.s32.totalorder %s55, %s69
      %p71 = scmp.eq.s32.totalorder %s24, 0
      %p72 = por %p70, %p71
      %s74 = sadd.s32 %s73, 1
      %p77 = scmp.eq.s32.totalorder %s18, 1
      %p78 = scmp.ne.s32.totalorder %s73, %s75
      %p79 = scmp.eq.s32.totalorder %s18, 0
      %p80 = por %p78, %p79
      %p81 = scmp.ne.s32.totalorder %s73, %s75
      %p82 = scmp.eq.s32.totalorder %s23, 1
      %p83 = por %p81, %p82
      %p84 = scmp.ne.s32.totalorder %s75, %s76
      %p85 = scmp.eq.s32.totalorder %s23, 0
      %p86 = por %p84, %p85
      %p87 = scmp.ne.s32.totalorder %s75, %s76
      %p88 = scmp.eq.s32.totalorder %s24, 1
      %p89 = por %p87, %p88
      %p91 = scmp.ne.s32.totalorder %s76, %s90
      %p92 = scmp.eq.s32.totalorder %s24, 0
      %p93 = por %p91, %p92
      %s95 = sadd.s32 %s94, 1
      %p98 = scmp.eq.s32.totalorder %s18, 1
      %p99 = scmp.ne.s32.totalorder %s94, %s96
      %p100 = scmp.eq.s32.totalorder %s18, 0
      %p101 = por %p99, %p100
      %p102 = scmp.ne.s32.totalorder %s94, %s96
      %p103 = scmp.eq.s32.totalorder %s23, 1
      %p104 = por %p102, %p103
      %p105 = scmp.ne.s32.totalorder %s96, %s97
      %p106 = scmp.eq.s32.totalorder %s23, 0
      %p107 = por %p105, %p106
      %p108 = scmp.ne.s32.totalorder %s96, %s97
      %p109 = scmp.eq.s32.totalorder %s24, 1
      %p110 = por %p108, %p109
      %p112 = scmp.ne.s32.totalorder %s97, %s111
      %p113 = scmp.eq.s32.totalorder %s24, 0
      %p114 = por %p112, %p113
      %s116 = sadd.s32 %s115, 1
      %p119 = scmp.eq.s32.totalorder %s18, 1
      %p120 = scmp.ne.s32.totalorder %s115, %s117
      %p121 = scmp.eq.s32.totalorder %s18, 0
      %p122 = por %p120, %p121
      %p123 = scmp.ne.s32.totalorder %s115, %s117
      %p124 = scmp.eq.s32.totalorder %s23, 1
      %p125 = por %p123, %p124
      %p126 = scmp.ne.s32.totalorder %s117, %s118
      %p127 = scmp.eq.s32.totalorder %s23, 0
      %p128 = por %p126, %p127
      %p129 = scmp.ne.s32.totalorder %s117, %s118
      %p130 = scmp.eq.s32.totalorder %s24, 1
      %p131 = por %p129, %p130
      %p133 = scmp.ne.s32.totalorder %s118, %s132
      %p134 = scmp.eq.s32.totalorder %s24, 0
      %p135 = por %p133, %p134
      %s137 = sadd.s32 %s136, 1
      %p140 = scmp.eq.s32.totalorder %s18, 1
      %p141 = scmp.ne.s32.totalorder %s136, %s138
      %p142 = scmp.eq.s32.totalorder %s18, 0
      %p143 = por %p141, %p142
      %p144 = scmp.ne.s32.totalorder %s136, %s138
      %p145 = scmp.eq.s32.totalorder %s23, 1
      %p146 = por %p144, %p145
      %p147 = scmp.ne.s32.totalorder %s138, %s139
      %p148 = scmp.eq.s32.totalorder %s23, 0
      %p149 = por %p147, %p148
      %p150 = scmp.ne.s32.totalorder %s138, %s139
      %p151 = scmp.eq.s32.totalorder %s24, 1
      %p152 = por %p150, %p151
      %p154 = scmp.ne.s32.totalorder %s139, %s153
      %p155 = scmp.eq.s32.totalorder %s24, 0
      %p156 = por %p154, %p155
      %s157 = ssub.s32 %s18, %s25
      %p158 = scmp.eq.s32.totalorder %s157, 0
      %s160 = sadd.s32 %s159, 1
      %s161 = scalar_select %p158, %s159, %s160
      %p164 = pneg %p158
      %p165 = scmp.eq.s32.totalorder %s18, 1
      %p166 = por %p164, %p165
      %p167 = scmp.ne.s32.totalorder %s159, %s162
      %p168 = scmp.eq.s32.totalorder %s18, 0
      %p169 = por %p167, %p168
      %p170 = scmp.ne.s32.totalorder %s159, %s162
      %p171 = scmp.eq.s32.totalorder %s23, 1
      %p172 = por %p170, %p171
      %p173 = scmp.ne.s32.totalorder %s162, %s163
      %p174 = scmp.eq.s32.totalorder %s23, 0
      %p175 = por %p173, %p174
      %p176 = scmp.ne.s32.totalorder %s162, %s163
      %p177 = scmp.eq.s32.totalorder %s24, 1
      %p178 = por %p176, %p177
      %p180 = scmp.ne.s32.totalorder %s163, %s179
      %p181 = scmp.eq.s32.totalorder %s24, 0
      %p182 = por %p180, %p181
      %p183 = scmp.le.s32.totalorder 1, %s18
      %p184 = scmp.lt.s32.totalorder %s18, 3
      %p185 = pnand %p183, %p184
      %p186 = pneg %p185
      // Predicated region
      $region9: #{tpu_custom_call.1} parent=5 // pred_check
        _
      $region10: #{tpu_custom_call.1} parent=5 // pred_check_branch
        %188 = sbr.rel (%p185) target = $region12
      $region11: #{tpu_custom_call.1} parent=5 // pred_region
        %s189 = ssub.s32 %s18, 1
        // Predicated region
        $region13: #{tpu_custom_call.1} parent=11 // pred_check
          %p190 = pneg %p65
        $region14: #{tpu_custom_call.1} parent=11 // pred_check_branch
          %192 = sbr.rel (%p190) target = $region16
        $region15: #{tpu_custom_call.1} parent=11 // pred_region
          _
        $region16: #{tpu_custom_call.1} parent=11 // pred_fallthru
          _
        // Predicated region
        $region17: #{tpu_custom_call.1} parent=11 // pred_check
          %p193 = pneg %p86
        $region18: #{tpu_custom_call.1} parent=11 // pred_check_branch
          %195 = sbr.rel (%p193) target = $region20
        $region19: #{tpu_custom_call.1} parent=11 // pred_region
          _
        $region20: #{tpu_custom_call.1} parent=11 // pred_fallthru
          _
        // Predicated region
        $region21: #{tpu_custom_call.1} parent=11 // pred_check
          %p196 = pneg %p107
        $region22: #{tpu_custom_call.1} parent=11 // pred_check_branch
          %198 = sbr.rel (%p196) target = $region24
        $region23: #{tpu_custom_call.1} parent=11 // pred_region
          _
        $region24: #{tpu_custom_call.1} parent=11 // pred_fallthru
          _
        // Predicated region
        $region25: #{tpu_custom_call.1} parent=11 // pred_check
          %p199 = pneg %p128
        $region26: #{tpu_custom_call.1} parent=11 // pred_check_branch
          %201 = sbr.rel (%p199) target = $region28
        $region27: #{tpu_custom_call.1} parent=11 // pred_region
          _
        $region28: #{tpu_custom_call.1} parent=11 // pred_fallthru
          _
        // Predicated region
        $region29: #{tpu_custom_call.1} parent=11 // pred_check
          %p202 = pneg %p149
        $region30: #{tpu_custom_call.1} parent=11 // pred_check_branch
          %204 = sbr.rel (%p202) target = $region32
        $region31: #{tpu_custom_call.1} parent=11 // pred_region
          _
        $region32: #{tpu_custom_call.1} parent=11 // pred_fallthru
          _
      $region12: #{tpu_custom_call.1} parent=5 // pred_fallthru
        _
      %p205 = scmp.lt.s32.totalorder %s18, 2
      // Predicated region
      $region33: #{tpu_custom_call.1} parent=5 // pred_check
        %p206 = pneg %p205
      $region34: #{tpu_custom_call.1} parent=5 // pred_check_branch
        %208 = sbr.rel (%p206) target = $region36
      $region35: #{tpu_custom_call.1} parent=5 // pred_region
        // Predicated region
        $region37: #{tpu_custom_call.1} parent=35 // pred_check
          %p209 = pneg %p38
        $region38: #{tpu_custom_call.1} parent=35 // pred_check_branch
          %211 = sbr.rel (%p209) target = $region40
        $region39: #{tpu_custom_call.1} parent=35 // pred_region
          %s212 = sand.u32 %s28, 1
          %s213 = scalar_lea.sflag [#allocation5], %s212
          %s214 = sand.u32 %s28, 1
          %s215 = smul.addr %s214, 16
          %s216 = scalar_lea.vmem [#allocation4], %s215
          %s218 = ssub.s32 256, 256
          %219 = vsyncadd %s213, %s218
          %s220 = smul.addr %s18, 4
          %s221 = smul.addr %s220, 64
          %s222 = scalar_lea.hbm %s0, %s221
          %s224 = sshll.u32 %s216, 4
          %s225 = int_to_ptr.vmem [resolvable:$true] %s224
          %227 = dma.hbm_to_vmem [thread:$0]  %s222, 256, %s225, %s213
        $region40: #{tpu_custom_call.1} parent=35 // pred_fallthru
          _
      $region36: #{tpu_custom_call.1} parent=5 // pred_fallthru
        _
      %p228 = scmp.le.s32.totalorder 1, %s18
      %p229 = scmp.lt.s32.totalorder %s18, 3
      %p230 = pnand %p228, %p229
      %p231 = pneg %p230
      // Predicated region
      $region41: #{tpu_custom_call.1} parent=5 // pred_check
        _
      $region42: #{tpu_custom_call.1} parent=5 // pred_check_branch
        %233 = sbr.rel (%p230) target = $region44
      $region43: #{tpu_custom_call.1} parent=5 // pred_region
        %s234 = ssub.s32 %s18, 1
        %s235 = sand.u32 %s31, 1
        %s236 = scalar_lea.sflag [#allocation5], %s235
        %s237 = sand.u32 %s31, 1
        %s238 = smul.addr %s237, 16
        %s239 = scalar_lea.vmem [#allocation4], %s238
        // Predicated region
        $region45: #{tpu_custom_call.1} parent=43 // pred_check
          %p240 = pneg %p44
        $region46: #{tpu_custom_call.1} parent=43 // pred_check_branch
          %242 = sbr.rel (%p240) target = $region48
        $region47: #{tpu_custom_call.1} parent=43 // pred_region
          %243 = dma.done %s236, 256
        $region48: #{tpu_custom_call.1} parent=43 // pred_fallthru
          _
        %s244 = sand.u32 %s31, 1
        %s245 = scalar_lea.sflag [#allocation5], %s244
        %s246 = sand.u32 %s31, 1
        %s247 = smul.addr %s246, 16
        %s248 = scalar_lea.vmem [#allocation4], %s247
        %p249 = pneg %p44
        %p250 = pneg %p41
        %p251 = pneg %p65
        %p252 = pneg %p62
        %p253 = pneg %p86
        %p254 = pneg %p83
        %p255 = pneg %p107
        %p256 = pneg %p104
        %p257 = pneg %p128
        %p258 = pneg %p125
        %p259 = pneg %p149
        %p260 = pneg %p146
        %p261 = pneg %p175
        %p262 = pneg %p172
        %s263 = sand.u32 %s162, 1
        %s264 = scalar_lea.sflag [#allocation6], %s263
        %s265 = sand.u32 %s162, 1
        %s266 = smul.addr %s265, 24
        %s267 = scalar_lea.vmem [#allocation7], %s266
        %p269 = scmp.eq.s32.totalorder %s23, 0
        // Predicated region
        $region49: #{tpu_custom_call.1} parent=43 // pred_check
          %p270 = pneg %p269
        $region50: #{tpu_custom_call.1} parent=43 // pred_check_branch
          %272 = sbr.rel (%p270) target = $region52
        $region51: #{tpu_custom_call.1} parent=43 // pred_region
          %273 = vst [vmem:[#allocation3] sm:$0xf] 0
          %274 = vst [vmem:[#allocation3 + $0x10] sm:$0xf] 0
        $region52: #{tpu_custom_call.1} parent=43 // pred_fallthru
          _
        %v275 = vld [vmem:[%s239] sm:$0xff]
        %v276 = vld [vmem:[%s239 + $0x8] sm:$0xf]
        %277 = vst [vmem:[#allocation2] sm:$0xff] %v275
        %278 = vst [vmem:[#allocation2 + $0x8] sm:$0xf] %v276
        %v279 = vld [vmem:[%s239] sm:$0xff]
        %v280 = vld [vmem:[%s239 + $0x8] sm:$0xff]
        %283 = vrot.lane.b32.xlu0 %v279, 127
        %v284 = vpop.permute.xlu0 %283
        %285 = vrot.lane.b32.xlu0 %v280, 127
        %v286 = vpop.permute.xlu0 %285
        %v287 = vrot.slane %v284, 4
        %v288 = vrot.slane %v286, 4
        %vm289 = vcmask 1043456
        %v290 = vsel %vm289, %v287, %v288
        %vm291 = vcmask 1039360
        %v292 = vsel %vm291, %v284, %v290
        %v293 = vsel %vm291, %v286, %v288
        %296 = vst [vmem:[#allocation2 + $0xc] sm:$0xff] %v292
        %297 = vst [vmem:[#allocation2 + $0x14] sm:$0xf] %v293
        %v298 = vld [vmem:[%s239] sm:$0xff]
        %v299 = vld [vmem:[%s239 + $0x8] sm:$0xff]
        %302 = vrot.lane.b32.xlu0 %v298, 126
        %v303 = vpop.permute.xlu0 %302
        %304 = vrot.lane.b32.xlu0 %v299, 126
        %v305 = vpop.permute.xlu0 %304
        %v306 = vrot.slane %v303, 4
        %v307 = vrot.slane %v305, 4
        %v308 = vsel %vm289, %v306, %v307
        %vm309 = vcmask 1031168
        %v310 = vsel %vm309, %v303, %v308
        %v311 = vsel %vm309, %v305, %v307
        %314 = vst [vmem:[#allocation2 + $0x18] sm:$0xff] %v310
        %315 = vst [vmem:[#allocation2 + $0x20] sm:$0xf] %v311
        %v316 = vld [vmem:[%s239] sm:$0xff]
        %v317 = vld [vmem:[%s239 + $0x8] sm:$0xff]
        %320 = vrot.lane.b32.xlu0 %v316, 110
        %v321 = vpop.permute.xlu0 %320
        %322 = vrot.lane.b32.xlu0 %v317, 110
        %v323 = vpop.permute.xlu0 %322
        %v324 = vrot.slane %v321, 4
        %v325 = vrot.slane %v323, 4
        %v326 = vsel %vm289, %v324, %v325
        %vm327 = vcmask 900096
        %v328 = vsel %vm327, %v321, %v326
        %v329 = vsel %vm327, %v323, %v325
        %332 = vst [vmem:[#allocation2 + $0x24] sm:$0xff] %v328
        %333 = vst [vmem:[#allocation2 + $0x2c] sm:$0xf] %v329
        %v334 = vld [vmem:[%s239] sm:$0xff]
        %v335 = vld [vmem:[%s239 + $0x8] sm:$0xff]
        %338 = vrot.lane.b32.xlu0 %v334, 109
        %v339 = vpop.permute.xlu0 %338
        %340 = vrot.lane.b32.xlu0 %v335, 109
        %v341 = vpop.permute.xlu0 %340
        %v342 = vrot.slane %v339, 4
        %v343 = vrot.slane %v341, 4
        %v344 = vsel %vm289, %v342, %v343
        %vm345 = vcmask 891904
        %v346 = vsel %vm345, %v339, %v344
        %v347 = vsel %vm345, %v341, %v343
        %350 = vst [vmem:[#allocation2 + $0x30] sm:$0xff] %v346
        %351 = vst [vmem:[#allocation2 + $0x38] sm:$0xf] %v347
        %v352 = vld [vmem:[%s239] sm:$0xff]
        %v353 = vld [vmem:[%s239 + $0x8] sm:$0xff]
        %356 = vrot.lane.b32.xlu0 %v352, 108
        %v357 = vpop.permute.xlu0 %356
        %358 = vrot.lane.b32.xlu0 %v353, 108
        %v359 = vpop.permute.xlu0 %358
        %v360 = vrot.slane %v357, 4
        %v361 = vrot.slane %v359, 4
        %v362 = vsel %vm289, %v360, %v361
        %vm363 = vcmask 883712
        %v364 = vsel %vm363, %v357, %v362
        %v365 = vsel %vm363, %v359, %v361
        %368 = vst [vmem:[#allocation2 + $0x3c] sm:$0xff] %v364
        %369 = vst [vmem:[#allocation2 + $0x44] sm:$0xf] %v365
        %v370 = vld [vmem:[%s239] sm:$0xff]
        %v371 = vld [vmem:[%s239 + $0x8] sm:$0xff]
        %374 = vrot.lane.b32.xlu0 %v370, 92
        %v375 = vpop.permute.xlu0 %374
        %376 = vrot.lane.b32.xlu0 %v371, 92
        %v377 = vpop.permute.xlu0 %376
        %v378 = vrot.slane %v375, 4
        %v379 = vrot.slane %v377, 4
        %v380 = vsel %vm289, %v378, %v379
        %vm381 = vcmask 752640
        %v382 = vsel %vm381, %v375, %v380
        %v383 = vsel %vm381, %v377, %v379
        %386 = vst [vmem:[#allocation2 + $0x48] sm:$0xff] %v382
        %387 = vst [vmem:[#allocation2 + $0x50] sm:$0xf] %v383
        %v388 = vld [vmem:[%s239] sm:$0xff]
        %v389 = vld [vmem:[%s239 + $0x8] sm:$0xff]
        %392 = vrot.lane.b32.xlu0 %v388, 91
        %v393 = vpop.permute.xlu0 %392
        %394 = vrot.lane.b32.xlu0 %v389, 91
        %v395 = vpop.permute.xlu0 %394
        %v396 = vrot.slane %v393, 4
        %v397 = vrot.slane %v395, 4
        %v398 = vsel %vm289, %v396, %v397
        %vm399 = vcmask 744448
        %v400 = vsel %vm399, %v393, %v398
        %v401 = vsel %vm399, %v395, %v397
        %404 = vst [vmem:[#allocation2 + $0x54] sm:$0xff] %v400
        %405 = vst [vmem:[#allocation2 + $0x5c] sm:$0xf] %v401
        %v406 = vld [vmem:[%s239] sm:$0xff]
        %v407 = vld [vmem:[%s239 + $0x8] sm:$0xff]
        %410 = vrot.lane.b32.xlu0 %v406, 90
        %v411 = vpop.permute.xlu0 %410
        %412 = vrot.lane.b32.xlu0 %v407, 90
        %v413 = vpop.permute.xlu0 %412
        %v414 = vrot.slane %v411, 4
        %v415 = vrot.slane %v413, 4
        %v416 = vsel %vm289, %v414, %v415
        %vm417 = vcmask 736256
        %v418 = vsel %vm417, %v411, %v416
        %v419 = vsel %vm417, %v413, %v415
        %422 = vst [vmem:[#allocation2 + $0x60] sm:$0xff] %v418
        %423 = vst [vmem:[#allocation2 + $0x68] sm:$0xf] %v419
        %v424 = vld [vmem:[%s1] sm:$0xf]
        %v425 = vld [vmem:[#allocation2] sm:$0xff]
        %v426 = vld [vmem:[#allocation2 + $0x8] sm:$0xf]
        %v427 = vld [vmem:[#allocation2 + $0xc] sm:$0xff]
        %v428 = vld [vmem:[#allocation2 + $0x14] sm:$0xf]
        %v429 = vld [vmem:[#allocation2 + $0x18] sm:$0xff]
        %v430 = vld [vmem:[#allocation2 + $0x20] sm:$0xf]
        %v431 = vld [vmem:[#allocation2 + $0x24] sm:$0xff]
        %v432 = vld [vmem:[#allocation2 + $0x2c] sm:$0xf]
        %v433 = vld [vmem:[#allocation2 + $0x30] sm:$0xff]
        %v434 = vld [vmem:[#allocation2 + $0x38] sm:$0xf]
        %v435 = vld [vmem:[#allocation2 + $0x3c] sm:$0xff]
        %v436 = vld [vmem:[#allocation2 + $0x44] sm:$0xf]
        %v437 = vld [vmem:[#allocation2 + $0x48] sm:$0xff]
        %v438 = vld [vmem:[#allocation2 + $0x50] sm:$0xf]
        %v439 = vld [vmem:[#allocation2 + $0x54] sm:$0xff]
        %v440 = vld [vmem:[#allocation2 + $0x5c] sm:$0xf]
        %v441 = vld [vmem:[#allocation2 + $0x60] sm:$0xff]
        %v442 = vld [vmem:[#allocation2 + $0x68] sm:$0xf]
        %v443 = vld [vmem:[%s2] sm:$0xff]
        %445 = vset.pattern.permute.xlu0 0
        %446 = vperm.xlu0 %445, %v443
        %v447 = vpop.permute.xlu0 %446
        %v467 = vunpack.c.l.b16 %v425
        %v468 = vunpack.c.h.b16 %v425
        %v469 = vunpack.c.l.b16 %v426
        %v470 = vunpack.c.l.b16 %v427
        %v471 = vunpack.c.h.b16 %v427
        %v472 = vunpack.c.l.b16 %v428
        %v473 = vunpack.c.l.b16 %v429
        %v474 = vunpack.c.h.b16 %v429
        %v475 = vunpack.c.l.b16 %v430
        %v476 = vunpack.c.l.b16 %v431
        %v477 = vunpack.c.h.b16 %v431
        %v478 = vunpack.c.l.b16 %v432
        %v479 = vunpack.c.l.b16 %v433
        %v480 = vunpack.c.h.b16 %v433
        %v481 = vunpack.c.l.b16 %v434
        %v482 = vunpack.c.l.b16 %v435
        %v483 = vunpack.c.h.b16 %v435
        %v484 = vunpack.c.l.b16 %v436
        %v485 = vunpack.c.l.b16 %v437
        %v486 = vunpack.c.h.b16 %v437
        %v487 = vunpack.c.l.b16 %v438
        %v488 = vunpack.c.l.b16 %v439
        %v489 = vunpack.c.h.b16 %v439
        %v490 = vunpack.c.l.b16 %v440
        %v491 = vunpack.c.l.b16 %v441
        %v492 = vunpack.c.h.b16 %v441
        %v493 = vunpack.c.l.b16 %v442
        %v494 = vpack.c.b16 %v470, %v467
        %v495 = vpack.c.b16 %v471, %v468
        %v496 = vpack.c.b16 %v472, %v469
        %v497 = vpack.c.b16 %v476, %v473
        %v498 = vpack.c.b16 %v477, %v474
        %v499 = vpack.c.b16 %v478, %v475
        %v500 = vpack.c.b16 %v482, %v479
        %v501 = vpack.c.b16 %v483, %v480
        %v502 = vpack.c.b16 %v484, %v481
        %v503 = vpack.c.b16 %v488, %v485
        %v504 = vpack.c.b16 %v489, %v486
        %v505 = vpack.c.b16 %v490, %v487
        %v506 = vpack.c.b16 %v491, %v491
        %v507 = vpack.c.b16 %v492, %v492
        %v508 = vpack.c.b16 %v493, %v493
        %vm521 = vcmask 588800
        %v523 = vsel %vm521, %v424, 0
        %vm525 = vcmask 1043456
        %v527 = vsel %vm525, %v506, 0
        %v530 = vsel %vm525, %v507, 0
        %v533 = vsel %vm525, %v508, 0
        %535 = vmatprep.subr.bf16.mxu0 0
        %536 = vmatpush1.bf16.msra.mxu0 0
        %537 = vmatprep.subr.bf16.mxu0 0
        %538 = vmatpush1.bf16.msra.mxu0 0
        %539 = vmatprep.subr.bf16.mxu0 0
        %540 = vmatpush1.bf16.msra.mxu0 0
        %541 = vmatprep.subr.bf16.mxu0 %v530
        %542 = vmatpush1.bf16.msra.mxu0 %v527
        %543 = vmatprep.subr.bf16.mxu0 %v504
        %544 = vmatpush1.bf16.msra.mxu0 %v503
        %545 = vmatprep.subr.bf16.mxu0 %v501
        %546 = vmatpush1.bf16.msra.mxu0 %v500
        %547 = vmatprep.subr.bf16.mxu0 %v498
        %548 = vmatpush1.bf16.msra.mxu0 %v497
        %549 = vmatprep.subr.bf16.mxu0 %v495
        %550 = vmatpush1.bf16.msra.mxu0 %v494
        %551 = vmatprep.subr.bf16.mxu0 0
        %552 = vmatpush2.bf16.msra.mxu0 0
        %553 = vmatprep.subr.bf16.mxu0 0
        %554 = vmatpush2.bf16.msra.mxu0 0
        %555 = vmatprep.subr.bf16.mxu0 0
        %556 = vmatpush2.bf16.msra.mxu0 0
        %557 = vmatprep.subr.bf16.mxu0 0
        %558 = vmatpush2.bf16.msra.mxu0 0
        %559 = vmatprep.subr.bf16.mxu0 0
        %560 = vmatpush2.bf16.msra.mxu0 0
        %561 = vmatprep.subr.bf16.mxu0 0
        %562 = vmatpush2.bf16.msra.mxu0 0
        %563 = vmatprep.subr.bf16.mxu0 0
        %564 = vmatpush2.bf16.msra.mxu0 0
        %565 = vmatprep.subr.bf16.mxu0 0
        %566 = vmatpush2.bf16.msra.mxu0 0
        %567 = vmatprep.mubr.bf16.mxu0 0
        %568 = vmatmul.mubr.bf16.gmra.mxu0 %v523
        %v569 = vpop.f32.mrf.mxu0
        %v570 = vadd.f32 %v447, %v569
        %v571 = vpop.f32.mrf.mxu0
        %v572 = vadd.f32 %v447, %v571
        %v573 = vpop.f32.mrf.mxu0
        %v574 = vpop.f32.mrf.mxu0
        %575 = vdwg.mxu0
        %576 = vmatprep.subr.bf16.mxu0 0
        %577 = vmatpush1.bf16.msra.mxu0 0
        %578 = vmatprep.subr.bf16.mxu0 0
        %579 = vmatpush1.bf16.msra.mxu0 0
        %580 = vmatprep.subr.bf16.mxu0 0
        %581 = vmatpush1.bf16.msra.mxu0 0
        %582 = vmatprep.subr.bf16.mxu0 0
        %583 = vmatpush1.bf16.msra.mxu0 %v533
        %584 = vmatprep.subr.bf16.mxu0 0
        %585 = vmatpush1.bf16.msra.mxu0 %v505
        %586 = vmatprep.subr.bf16.mxu0 0
        %587 = vmatpush1.bf16.msra.mxu0 %v502
        %588 = vmatprep.subr.bf16.mxu0 0
        %589 = vmatpush1.bf16.msra.mxu0 %v499
        %590 = vmatprep.subr.bf16.mxu0 0
        %591 = vmatpush1.bf16.msra.mxu0 %v496
        %592 = vmatprep.subr.bf16.mxu0 0
        %593 = vmatpush2.bf16.msra.mxu0 0
        %594 = vmatprep.subr.bf16.mxu0 0
        %595 = vmatpush2.bf16.msra.mxu0 0
        %596 = vmatprep.subr.bf16.mxu0 0
        %597 = vmatpush2.bf16.msra.mxu0 0
        %598 = vmatprep.subr.bf16.mxu0 0
        %599 = vmatpush2.bf16.msra.mxu0 0
        %600 = vmatprep.subr.bf16.mxu0 0
        %601 = vmatpush2.bf16.msra.mxu0 0
        %602 = vmatprep.subr.bf16.mxu0 0
        %603 = vmatpush2.bf16.msra.mxu0 0
        %604 = vmatprep.subr.bf16.mxu0 0
        %605 = vmatpush2.bf16.msra.mxu0 0
        %606 = vmatprep.subr.bf16.mxu0 0
        %607 = vmatpush2.bf16.msra.mxu0 0
        %608 = vmatprep.mubr.bf16.mxu0 0
        %609 = vmatmul.mubr.bf16.gmra.mxu0 %v523
        %v610 = vpop.f32.mrf.mxu0
        %v611 = vadd.f32 %v447, %v610
        %v612 = vpop.f32.mrf.mxu0
        %v613 = vpop.f32.mrf.mxu0
        %v614 = vpop.f32.mrf.mxu0
        %615 = vdwg.mxu0
        %v616 = vmax.f32 %v570, 0.0
        %v617 = vmax.f32 %v572, 0.0
        %v618 = vmax.f32 %v611, 0.0
        %v619 = vld [vmem:[%s5] sm:$0x7]
        %v621 = vlaneseq
        %v622 = vshrl.u32 %v621, 7
        %v623 = vsub.s32 0, %v622
        %v624 = vrot.slane %v619, %v623
        %v625 = vlaneseq
        %v626 = vshrl.u32 %v625, 7
        %v627 = vsub.s32 1, %v626
        %v628 = vrot.slane %v619, %v627
        %v629 = vlaneseq
        %v630 = vshrl.u32 %v629, 7
        %v631 = vsub.s32 2, %v630
        %v632 = vrot.slane %v619, %v631
        %v636 = vmul.f32 %v616, %v624
        %v637 = vmul.f32 %v617, %v628
        %v638 = vmul.f32 %v618, %v632
        %v639 = vpack.c.bf16 %v636, %v636
        %v640 = vpack.c.bf16 %v637, %v637
        %v641 = vpack.c.bf16 %v638, %v638
        %v645 = vunpack.c.l.b16 %v639
        %v646 = vunpack.c.l.b16 %v640
        %v647 = vunpack.c.l.b16 %v641
        %v648 = vpack.c.b16 %v646, %v645
        %v649 = vpack.c.b16 %v647, %v647
        %652 = vst [vmem:[#allocation3 + $0x4] sm:$0xff] %v648
        %653 = vst [vmem:[#allocation3 + $0xc] sm:$0xf] %v649
        %v654 = vld [vmem:[#allocation3] sm:$0xff]
        %v655 = vld [vmem:[#allocation3 + $0x8] sm:$0xff]
        %658 = vrot.lane.b32.xlu0 %v654, 19
        %v659 = vpop.permute.xlu0 %658
        %660 = vrot.lane.b32.xlu0 %v655, 19
        %v661 = vpop.permute.xlu0 %660
        %v662 = vrot.slane %v659, 4
        %v663 = vrot.slane %v661, 4
        %v664 = vsel %vm289, %v662, %v663
        %vm665 = vcmask 154624
        %v666 = vsel %vm665, %v659, %v664
        %v667 = vsel %vm665, %v661, %v663
        %670 = vst [vmem:[#allocation2] sm:$0xff] %v666
        %671 = vst [vmem:[#allocation2 + $0x8] sm:$0xf] %v667
        %v672 = vld [vmem:[#allocation3] sm:$0xff]
        %v673 = vld [vmem:[#allocation3 + $0x8] sm:$0xff]
        %676 = vrot.lane.b32.xlu0 %v672, 18
        %v677 = vpop.permute.xlu0 %676
        %678 = vrot.lane.b32.xlu0 %v673, 18
        %v679 = vpop.permute.xlu0 %678
        %v680 = vrot.slane %v677, 4
        %v681 = vrot.slane %v679, 4
        %v682 = vsel %vm289, %v680, %v681
        %vm683 = vcmask 146432
        %v684 = vsel %vm683, %v677, %v682
        %v685 = vsel %vm683, %v679, %v681
        %688 = vst [vmem:[#allocation2 + $0xc] sm:$0xff] %v684
        %689 = vst [vmem:[#allocation2 + $0x14] sm:$0xf] %v685
        %v690 = vld [vmem:[#allocation3] sm:$0xff]
        %v691 = vld [vmem:[#allocation3 + $0x8] sm:$0xff]
        %694 = vrot.lane.b32.xlu0 %v690, 17
        %v695 = vpop.permute.xlu0 %694
        %696 = vrot.lane.b32.xlu0 %v691, 17
        %v697 = vpop.permute.xlu0 %696
        %v698 = vrot.slane %v695, 4
        %v699 = vrot.slane %v697, 4
        %v700 = vsel %vm289, %v698, %v699
        %vm701 = vcmask 138240
        %v702 = vsel %vm701, %v695, %v700
        %v703 = vsel %vm701, %v697, %v699
        %706 = vst [vmem:[#allocation2 + $0x18] sm:$0xff] %v702
        %707 = vst [vmem:[#allocation2 + $0x20] sm:$0xf] %v703
        %v708 = vld [vmem:[#allocation3] sm:$0xff]
        %v709 = vld [vmem:[#allocation3 + $0x8] sm:$0xff]
        %712 = vrot.lane.b32.xlu0 %v708, 1
        %v713 = vpop.permute.xlu0 %712
        %714 = vrot.lane.b32.xlu0 %v709, 1
        %v715 = vpop.permute.xlu0 %714
        %v716 = vrot.slane %v713, 4
        %v717 = vrot.slane %v715, 4
        %v718 = vsel %vm289, %v716, %v717
        %vm719 = vcmask 7168
        %v720 = vsel %vm719, %v713, %v718
        %v721 = vsel %vm719, %v715, %v717
        %724 = vst [vmem:[#allocation2 + $0x24] sm:$0xff] %v720
        %725 = vst [vmem:[#allocation2 + $0x2c] sm:$0xf] %v721
        %v726 = vld [vmem:[#allocation3 + $0x4] sm:$0xff]
        %v727 = vld [vmem:[#allocation3 + $0xc] sm:$0xf]
        %728 = vst [vmem:[#allocation2 + $0x30] sm:$0xff] %v726
        %729 = vst [vmem:[#allocation2 + $0x38] sm:$0xf] %v727
        %v730 = vld [vmem:[#allocation3 + $0x4] sm:$0xff]
        %v731 = vld [vmem:[#allocation3 + $0xc] sm:$0xff]
        %734 = vrot.lane.b32.xlu0 %v730, 127
        %v735 = vpop.permute.xlu0 %734
        %736 = vrot.lane.b32.xlu0 %v731, 127
        %v737 = vpop.permute.xlu0 %736
        %v738 = vrot.slane %v735, 4
        %v739 = vrot.slane %v737, 4
        %v740 = vsel %vm289, %v738, %v739
        %v741 = vsel %vm291, %v735, %v740
        %v742 = vsel %vm291, %v737, %v739
        %745 = vst [vmem:[#allocation2 + $0x3c] sm:$0xff] %v741
        %746 = vst [vmem:[#allocation2 + $0x44] sm:$0xf] %v742
        %v747 = vld [vmem:[#allocation3 + $0x4] sm:$0xff]
        %v748 = vld [vmem:[#allocation3 + $0xc] sm:$0xff]
        %751 = vrot.lane.b32.xlu0 %v747, 111
        %v752 = vpop.permute.xlu0 %751
        %753 = vrot.lane.b32.xlu0 %v748, 111
        %v754 = vpop.permute.xlu0 %753
        %v755 = vrot.slane %v752, 4
        %v756 = vrot.slane %v754, 4
        %v757 = vsel %vm289, %v755, %v756
        %vm758 = vcmask 908288
        %v759 = vsel %vm758, %v752, %v757
        %v760 = vsel %vm758, %v754, %v756
        %763 = vst [vmem:[#allocation2 + $0x48] sm:$0xff] %v759
        %764 = vst [vmem:[#allocation2 + $0x50] sm:$0xf] %v760
        %v765 = vld [vmem:[#allocation3 + $0x4] sm:$0xff]
        %v766 = vld [vmem:[#allocation3 + $0xc] sm:$0xff]
        %769 = vrot.lane.b32.xlu0 %v765, 110
        %v770 = vpop.permute.xlu0 %769
        %771 = vrot.lane.b32.xlu0 %v766, 110
        %v772 = vpop.permute.xlu0 %771
        %v773 = vrot.slane %v770, 4
        %v774 = vrot.slane %v772, 4
        %v775 = vsel %vm289, %v773, %v774
        %v776 = vsel %vm327, %v770, %v775
        %v777 = vsel %vm327, %v772, %v774
        %780 = vst [vmem:[#allocation2 + $0x54] sm:$0xff] %v776
        %781 = vst [vmem:[#allocation2 + $0x5c] sm:$0xf] %v777
        %v782 = vld [vmem:[#allocation3 + $0x4] sm:$0xff]
        %v783 = vld [vmem:[#allocation3 + $0xc] sm:$0xff]
        %786 = vrot.lane.b32.xlu0 %v782, 109
        %v787 = vpop.permute.xlu0 %786
        %788 = vrot.lane.b32.xlu0 %v783, 109
        %v789 = vpop.permute.xlu0 %788
        %v790 = vrot.slane %v787, 4
        %v791 = vrot.slane %v789, 4
        %v792 = vsel %vm289, %v790, %v791
        %v793 = vsel %vm345, %v787, %v792
        %v794 = vsel %vm345, %v789, %v791
        %797 = vst [vmem:[#allocation2 + $0x60] sm:$0xff] %v793
        %798 = vst [vmem:[#allocation2 + $0x68] sm:$0xf] %v794
        %v799 = vld [vmem:[%s3] sm:$0xf]
        %v800 = vld [vmem:[#allocation2] sm:$0xff]
        %v801 = vld [vmem:[#allocation2 + $0x8] sm:$0xf]
        %v802 = vld [vmem:[#allocation2 + $0xc] sm:$0xff]
        %v803 = vld [vmem:[#allocation2 + $0x14] sm:$0xf]
        %v804 = vld [vmem:[#allocation2 + $0x18] sm:$0xff]
        %v805 = vld [vmem:[#allocation2 + $0x20] sm:$0xf]
        %v806 = vld [vmem:[#allocation2 + $0x24] sm:$0xff]
        %v807 = vld [vmem:[#allocation2 + $0x2c] sm:$0xf]
        %v808 = vld [vmem:[#allocation2 + $0x30] sm:$0xff]
        %v809 = vld [vmem:[#allocation2 + $0x38] sm:$0xf]
        %v810 = vld [vmem:[#allocation2 + $0x3c] sm:$0xff]
        %v811 = vld [vmem:[#allocation2 + $0x44] sm:$0xf]
        %v812 = vld [vmem:[#allocation2 + $0x48] sm:$0xff]
        %v813 = vld [vmem:[#allocation2 + $0x50] sm:$0xf]
        %v814 = vld [vmem:[#allocation2 + $0x54] sm:$0xff]
        %v815 = vld [vmem:[#allocation2 + $0x5c] sm:$0xf]
        %v816 = vld [vmem:[#allocation2 + $0x60] sm:$0xff]
        %v817 = vld [vmem:[#allocation2 + $0x68] sm:$0xf]
        %v818 = vld [vmem:[%s4] sm:$0xff]
        %820 = vset.pattern.permute.xlu0 0
        %821 = vperm.xlu0 %820, %v818
        %v822 = vpop.permute.xlu0 %821
        %v842 = vunpack.c.l.b16 %v800
        %v843 = vunpack.c.h.b16 %v800
        %v844 = vunpack.c.l.b16 %v801
        %v845 = vunpack.c.l.b16 %v802
        %v846 = vunpack.c.h.b16 %v802
        %v847 = vunpack.c.l.b16 %v803
        %v848 = vunpack.c.l.b16 %v804
        %v849 = vunpack.c.h.b16 %v804
        %v850 = vunpack.c.l.b16 %v805
        %v851 = vunpack.c.l.b16 %v806
        %v852 = vunpack.c.h.b16 %v806
        %v853 = vunpack.c.l.b16 %v807
        %v854 = vunpack.c.l.b16 %v808
        %v855 = vunpack.c.h.b16 %v808
        %v856 = vunpack.c.l.b16 %v809
        %v857 = vunpack.c.l.b16 %v810
        %v858 = vunpack.c.h.b16 %v810
        %v859 = vunpack.c.l.b16 %v811
        %v860 = vunpack.c.l.b16 %v812
        %v861 = vunpack.c.h.b16 %v812
        %v862 = vunpack.c.l.b16 %v813
        %v863 = vunpack.c.l.b16 %v814
        %v864 = vunpack.c.h.b16 %v814
        %v865 = vunpack.c.l.b16 %v815
        %v866 = vunpack.c.l.b16 %v816
        %v867 = vunpack.c.h.b16 %v816
        %v868 = vunpack.c.l.b16 %v817
        %v869 = vpack.c.b16 %v845, %v842
        %v870 = vpack.c.b16 %v846, %v843
        %v871 = vpack.c.b16 %v847, %v844
        %v872 = vpack.c.b16 %v851, %v848
        %v873 = vpack.c.b16 %v852, %v849
        %v874 = vpack.c.b16 %v853, %v850
        %v875 = vpack.c.b16 %v857, %v854
        %v876 = vpack.c.b16 %v858, %v855
        %v877 = vpack.c.b16 %v859, %v856
        %v878 = vpack.c.b16 %v863, %v860
        %v879 = vpack.c.b16 %v864, %v861
        %v880 = vpack.c.b16 %v865, %v862
        %v881 = vpack.c.b16 %v866, %v866
        %v882 = vpack.c.b16 %v867, %v867
        %v883 = vpack.c.b16 %v868, %v868
        %v897 = vsel %vm521, %v799, 0
        %v900 = vsel %vm525, %v881, 0
        %v903 = vsel %vm525, %v882, 0
        %v906 = vsel %vm525, %v883, 0
        %908 = vmatprep.subr.bf16.mxu0 0
        %909 = vmatpush1.bf16.msra.mxu0 0
        %910 = vmatprep.subr.bf16.mxu0 0
        %911 = vmatpush1.bf16.msra.mxu0 0
        %912 = vmatprep.subr.bf16.mxu0 0
        %913 = vmatpush1.bf16.msra.mxu0 0
        %914 = vmatprep.subr.bf16.mxu0 %v903
        %915 = vmatpush1.bf16.msra.mxu0 %v900
        %916 = vmatprep.subr.bf16.mxu0 %v879
        %917 = vmatpush1.bf16.msra.mxu0 %v878
        %918 = vmatprep.subr.bf16.mxu0 %v876
        %919 = vmatpush1.bf16.msra.mxu0 %v875
        %920 = vmatprep.subr.bf16.mxu0 %v873
        %921 = vmatpush1.bf16.msra.mxu0 %v872
        %922 = vmatprep.subr.bf16.mxu0 %v870
        %923 = vmatpush1.bf16.msra.mxu0 %v869
        %924 = vmatprep.subr.bf16.mxu0 0
        %925 = vmatpush2.bf16.msra.mxu0 0
        %926 = vmatprep.subr.bf16.mxu0 0
        %927 = vmatpush2.bf16.msra.mxu0 0
        %928 = vmatprep.subr.bf16.mxu0 0
        %929 = vmatpush2.bf16.msra.mxu0 0
        %930 = vmatprep.subr.bf16.mxu0 0
        %931 = vmatpush2.bf16.msra.mxu0 0
        %932 = vmatprep.subr.bf16.mxu0 0
        %933 = vmatpush2.bf16.msra.mxu0 0
        %934 = vmatprep.subr.bf16.mxu0 0
        %935 = vmatpush2.bf16.msra.mxu0 0
        %936 = vmatprep.subr.bf16.mxu0 0
        %937 = vmatpush2.bf16.msra.mxu0 0
        %938 = vmatprep.subr.bf16.mxu0 0
        %939 = vmatpush2.bf16.msra.mxu0 0
        %940 = vmatprep.mubr.bf16.mxu0 0
        %941 = vmatmul.mubr.bf16.gmra.mxu0 %v897
        %v942 = vpop.f32.mrf.mxu0
        %v943 = vadd.f32 %v822, %v942
        %v944 = vpop.f32.mrf.mxu0
        %v945 = vadd.f32 %v822, %v944
        %v946 = vpop.f32.mrf.mxu0
        %v947 = vpop.f32.mrf.mxu0
        %948 = vdwg.mxu0
        %949 = vmatprep.subr.bf16.mxu0 0
        %950 = vmatpush1.bf16.msra.mxu0 0
        %951 = vmatprep.subr.bf16.mxu0 0
        %952 = vmatpush1.bf16.msra.mxu0 0
        %953 = vmatprep.subr.bf16.mxu0 0
        %954 = vmatpush1.bf16.msra.mxu0 0
        %955 = vmatprep.subr.bf16.mxu0 0
        %956 = vmatpush1.bf16.msra.mxu0 %v906
        %957 = vmatprep.subr.bf16.mxu0 0
        %958 = vmatpush1.bf16.msra.mxu0 %v880
        %959 = vmatprep.subr.bf16.mxu0 0
        %960 = vmatpush1.bf16.msra.mxu0 %v877
        %961 = vmatprep.subr.bf16.mxu0 0
        %962 = vmatpush1.bf16.msra.mxu0 %v874
        %963 = vmatprep.subr.bf16.mxu0 0
        %964 = vmatpush1.bf16.msra.mxu0 %v871
        %965 = vmatprep.subr.bf16.mxu0 0
        %966 = vmatpush2.bf16.msra.mxu0 0
        %967 = vmatprep.subr.bf16.mxu0 0
        %968 = vmatpush2.bf16.msra.mxu0 0
        %969 = vmatprep.subr.bf16.mxu0 0
        %970 = vmatpush2.bf16.msra.mxu0 0
        %971 = vmatprep.subr.bf16.mxu0 0
        %972 = vmatpush2.bf16.msra.mxu0 0
        %973 = vmatprep.subr.bf16.mxu0 0
        %974 = vmatpush2.bf16.msra.mxu0 0
        %975 = vmatprep.subr.bf16.mxu0 0
        %976 = vmatpush2.bf16.msra.mxu0 0
        %977 = vmatprep.subr.bf16.mxu0 0
        %978 = vmatpush2.bf16.msra.mxu0 0
        %979 = vmatprep.subr.bf16.mxu0 0
        %980 = vmatpush2.bf16.msra.mxu0 0
        %981 = vmatprep.mubr.bf16.mxu0 0
        %982 = vmatmul.mubr.bf16.gmra.mxu0 %v897
        %v983 = vpop.f32.mrf.mxu0
        %v984 = vadd.f32 %v822, %v983
        %v985 = vpop.f32.mrf.mxu0
        %v986 = vpop.f32.mrf.mxu0
        %v987 = vpop.f32.mrf.mxu0
        %988 = vdwg.mxu0
        %v989 = vld [vmem:[%s239] sm:$0xff]
        %v990 = vld [vmem:[%s239 + $0x8] sm:$0xff]
        %v991 = vunpack.c.l.bf16 %v989
        %v992 = vunpack.c.h.bf16 %v989
        %v993 = vunpack.c.l.bf16 %v990
        %v994 = vunpack.c.h.bf16 %v990
        %999 = vrot.lane.b32.xlu0 %v991, 109
        %v1000 = vpop.permute.xlu0 %999
        %1001 = vrot.lane.b32.xlu0 %v992, 109
        %v1002 = vpop.permute.xlu0 %1001
        %1003 = vrot.lane.b32.xlu0 %v993, 109
        %v1004 = vpop.permute.xlu0 %1003
        %1005 = vrot.lane.b32.xlu0 %v994, 109
        %v1006 = vpop.permute.xlu0 %1005
        %vm1007 = vcmask 891904
        %v1008 = vsel %vm1007, %v1000, %v1002
        %v1009 = vsel %vm1007, %v1002, %v1004
        %v1010 = vsel %vm1007, %v1004, %v1006
        %v1014 = vadd.f32 %v943, %v1008
        %v1015 = vadd.f32 %v945, %v1009
        %v1016 = vadd.f32 %v984, %v1010
        %1017 = vst [vmem:[%s267] sm:$0xff] %v1014
        %1018 = vst [vmem:[%s267 + $0x8] sm:$0xff] %v1015
        %1019 = vst [vmem:[%s267 + $0x10] sm:$0xff] %v1016
        %s1020 = sand.u32 %s162, 1
        %s1021 = scalar_lea.sflag [#allocation6], %s1020
        %s1022 = sand.u32 %s162, 1
        %s1023 = smul.addr %s1022, 24
        %s1024 = scalar_lea.vmem [#allocation7], %s1023
        // Predicated region
        $region53: #{tpu_custom_call.1} parent=43 // pred_check
          %p1025 = pneg %p172
        $region54: #{tpu_custom_call.1} parent=43 // pred_check_branch
          %1027 = sbr.rel (%p1025) target = $region56
        $region55: #{tpu_custom_call.1} parent=43 // pred_region
          %s1029 = ssub.s32 384, 384
          %1030 = vsyncadd %s1021, %s1029
          %s1031 = smul.addr %s23, 3
          %s1032 = smul.addr %s1031, 128
          %s1033 = scalar_lea.hbm %s6, %s1032
          %s1035 = sshll.u32 %s1024, 4
          %s1036 = int_to_ptr.vmem [resolvable:$true] %s1035
          %1038 = dma.vmem_to_hbm [thread:$0]  %s1036, 384, %s1033, %s1021
        $region56: #{tpu_custom_call.1} parent=43 // pred_fallthru
          _
      $region44: #{tpu_custom_call.1} parent=5 // pred_fallthru
        _
      %p1039 = scmp.le.s32.totalorder 2, %s18
      // Predicated region
      $region57: #{tpu_custom_call.1} parent=5 // pred_check
        %p1040 = pneg %p1039
      $region58: #{tpu_custom_call.1} parent=5 // pred_check_branch
        %1042 = sbr.rel (%p1040) target = $region60
      $region59: #{tpu_custom_call.1} parent=5 // pred_region
        %s1043 = ssub.s32 %s18, 2
        // Predicated region
        $region61: #{tpu_custom_call.1} parent=59 // pred_check
          %p1044 = pneg %p178
        $region62: #{tpu_custom_call.1} parent=59 // pred_check_branch
          %1046 = sbr.rel (%p1044) target = $region64
        $region63: #{tpu_custom_call.1} parent=59 // pred_region
          %s1047 = sand.u32 %s163, 1
          %s1048 = scalar_lea.sflag [#allocation6], %s1047
          %s1049 = sand.u32 %s163, 1
          %s1050 = smul.addr %s1049, 24
          %s1051 = scalar_lea.vmem [#allocation7], %s1050
          %1052 = dma.done %s1048, 384
        $region64: #{tpu_custom_call.1} parent=59 // pred_fallthru
          _
      $region60: #{tpu_custom_call.1} parent=5 // pred_fallthru
        _
    $region6: #{tpu_custom_call.1} parent=1 // loop_footer
      %s22 = sadd.s32 1, %s18
    $region7: #{tpu_custom_call.1} parent=1 // loop_footer_branch
      %17 = sbr.rel target = $region3
    $region8: #{tpu_custom_call.1} parent=1 // loop_exit
      _
    %1053 = vsyncpa [#allocation5], 1
    %s1054 = scalar_lea.sflag [#allocation5], 1
    %1055 = vsyncpa %s1054, 1
    %1056 = vsyncpa [#allocation6], 1
    %s1057 = scalar_lea.sflag [#allocation6], 1
    %1058 = vsyncpa %s1057, 1

</llo_original>
